<compile_context>
chip_gen: v7x
topology: tpu7x:2x2x1
jax: 0.10.0
libtpu: 0.0.40
codegen_flags: <defaults>
</compile_context>

<pallas_src>
import functools
import math

import jax
import jax.numpy as jnp
from jax.experimental import pallas as pl
from jax.experimental.pallas import tpu as pltpu


def _round_up(x, m):
    return (x + m - 1) // m * m


def _pick_k_tile(k_rounded, max_tk):
    """Largest 128-multiple tile <= max_tk, preferring divisors of k_rounded."""
    if k_rounded <= max_tk:
        return k_rounded
    for cand in range(max_tk, 127, -128):
        if k_rounded % cand == 0:
            return cand
    return max_tk


def _ffn_kernel(x_ref, wt_ref, b_ref, *rest, negative_slope, has_residual):
    if has_residual:
        r_ref, o_ref = rest
    else:
        (o_ref,) = rest

    k = pl.program_id(2)

    @pl.when(k == 0)
    def _():
        o_ref[...] = jnp.zeros_like(o_ref)

    # (TM, TK) @ (TK, TN) on the MXU (bf16 or f32 inputs, f32 accumulation),
    # summed directly into the k-resident f32 output tile (no acc scratch).
    o_ref[...] += jnp.dot(x_ref[...], wt_ref[...],
                          preferred_element_type=jnp.float32)

    @pl.when(k == pl.num_programs(2) - 1)
    def _():
        y = o_ref[...] + b_ref[...]                      # bias (1, TN) broadcast
        slope = jnp.float32(negative_slope)
        y = jnp.maximum(y, slope * y)                    # LeakyReLU (0 < slope < 1)
        if has_residual:
            y = y + r_ref[...].astype(jnp.float32)
        o_ref[...] = y


def prepare_ffn_weights(weight, bias, indices=None, *, tn=512, tk=2048,
                        compute_dtype=jnp.bfloat16):
    """Per-weight preprocessing, hoisted so it can run once and be reused.

    Folds the optional output-column gather into W/b (valid because the
    elementwise activation commutes with the gather), transposes to a
    lane-dense (K, N) layout, pads to tile multiples and casts to the MXU
    compute dtype.
    """
    weight = jnp.asarray(weight)
    bias = jnp.asarray(bias)
    if indices is not None:
        idx = jnp.asarray(indices, dtype=jnp.int32)
        if idx.size == 0:
            raise ValueError("FeedForward received empty indices — nothing to predict.")
        weight = weight[idx]
        bias = bias[idx]

    N, K = weight.shape
    TN = min(tn, _round_up(N, 128))
    Np = _round_up(N, TN)
    Kr = _round_up(K, 128)
    TK = _pick_k_tile(Kr, tk)
    Kp = _round_up(K, TK)

    wt = weight.T.astype(compute_dtype)                  # (K, N): lane-dense cols
    if (Kp, Np) != (K, N):
        wt = jnp.pad(wt, ((0, Kp - K), (0, Np - N)))
    b = jnp.asarray(bias, jnp.float32)
    if Np != N:
        b = jnp.pad(b, (0, Np - N))
    b = b.reshape(1, Np)

    return dict(wt=wt, b=b, N=N, K=K, TN=TN, TK=TK, Np=Np, Kp=Kp,
                compute_dtype=compute_dtype)


def feed_forward_prepared(x, prepared, *, residual=False, negative_slope=0.1,
                          tm=512):
    """Run the FFN kernel with pre-processed (padded / bf16) weights."""
    x = jnp.asarray(x)
    lead = x.shape[:-1]
    K = x.shape[-1]
    if K != prepared["K"]:
        raise ValueError(f"x last dim {K} != prepared K {prepared['K']}")

    N, TN, TK, Np, Kp = (prepared[k] for k in ("N", "TN", "TK", "Np", "Kp"))
    cdt = prepared["compute_dtype"]

    M = int(math.prod(lead)) if lead else 1
    x2 = x.reshape(M, K).astype(jnp.float32)

    TM = min(tm, _round_up(M, 8))
    Mp = _round_up(M, TM)

    xc = x2.astype(cdt)
    xp = xc if (Mp == M and Kp == K) else jnp.pad(xc, ((0, Mp - M), (0, Kp - K)))

    has_res = bool(residual) and (K == N)     # matches x.size(-1) == y.size(-1)

    # Leading grid axis = output-column tiles so a v7x megacore split halves
    # the dominant (weight) HBM traffic per TensorCore.
    grid = (Np // TN, Mp // TM, Kp // TK)

    in_specs = [
        pl.BlockSpec((TM, TK), lambda j, i, k: (i, k)),   # x tile
        pl.BlockSpec((TK, TN), lambda j, i, k: (k, j)),   # W^T tile
        pl.BlockSpec((1, TN), lambda j, i, k: (0, j)),    # bias row
    ]
    args = [xp, prepared["wt"], prepared["b"]]

    res_itemsize = 0
    if has_res:
        if Kp == Np:
            # Reuse the already-padded x as the residual operand (no extra copy).
            args.append(xp)
            res_itemsize = jnp.dtype(cdt).itemsize
        else:
            rp = x2 if (Mp == M and Np == N) else jnp.pad(
                x2, ((0, Mp - M), (0, Np - N)))
            args.append(rp)
            res_itemsize = 4
        in_specs.append(pl.BlockSpec((TM, TN), lambda j, i, k: (i, j)))

    # VMEM budget for the double-buffered set (inputs + bias + output
    # [+ residual]), with headroom; clamped so it also fits v7x's 64 MiB.
    itemsize = jnp.dtype(cdt).itemsize
    est = 2 * (TM * TK * itemsize + TK * TN * itemsize + TN * 4 + TM * TN * 4
               + TM * TN * res_itemsize)
    vmem_limit = int(min(max(2 * est, 32 << 20), 96 << 20))

    kernel = functools.partial(_ffn_kernel,
                               negative_slope=float(negative_slope),
                               has_residual=has_res)

    out = pl.pallas_call(
        kernel,
        out_shape=jax.ShapeDtypeStruct((Mp, Np), jnp.float32),
        grid=grid,
        in_specs=in_specs,
        out_specs=pl.BlockSpec((TM, TN), lambda j, i, k: (i, j)),
        compiler_params=pltpu.CompilerParams(
            dimension_semantics=("parallel", "parallel", "arbitrary"),
            vmem_limit_bytes=vmem_limit),
    )(*args)

    return out[:M, :N].reshape(*lead, N)


def feed_forward(x, weight, bias, indices=None, residual=False,
                 negative_slope=0.1, compute_dtype=jnp.bfloat16,
                 tm=512, tn=512, tk=2048):
    """Convenience wrapper: prepare weights then run (prefer hoisting
    prepare_ffn_weights() out of the hot path for repeated calls)."""
    prepared = prepare_ffn_weights(weight, bias, indices=indices, tn=tn, tk=tk,
                                   compute_dtype=compute_dtype)
    return feed_forward_prepared(x, prepared, residual=residual,
                                 negative_slope=negative_slope, tm=tm)


def _reference(x, weight, bias, indices=None, residual=False, slope=0.1):
    y = x @ weight.T + bias
    y = jnp.where(y >= 0, y, slope * y)
    if indices is not None:
        y = y[..., jnp.asarray(indices)]
    if residual and x.shape[-1] == y.shape[-1]:
        y = y + x
    return y


if __name__ == "__main__":
    key = jax.random.PRNGKey(0)
    kx, kw, kb = jax.random.split(key, 3)

    B, S, N_INP, N_OUT = 2, 8, 32, 64
    x = jax.random.normal(kx, (B, S, N_INP), dtype=jnp.float32)
    bound = 1.0 / (N_INP ** 0.5)
    weight = jax.random.uniform(kw, (N_OUT, N_INP), minval=-bound, maxval=bound,
                                dtype=jnp.float32)
    bias = jax.random.uniform(kb, (N_OUT,), minval=-bound, maxval=bound,
                              dtype=jnp.float32)

    # Case 1: plain forward, f32 compute path (bit-accurate check).
    out = feed_forward(x, weight, bias, compute_dtype=jnp.float32)
    out = jax.block_until_ready(out)
    ref = _reference(x, weight, bias)
    assert out.shape == (B, S, N_OUT)
    assert jnp.allclose(out, ref, atol=1e-5, rtol=1e-5)

    # Case 2: default bf16 MXU path, indices gather + residual, with the
    # weight preprocessing hoisted out of the call (prepared once, reused).
    idx = jnp.arange(0, N_OUT, 2, dtype=jnp.int32)          # 32 indices == n_inp
    prepared = prepare_ffn_weights(weight, bias, indices=idx)
    out2 = feed_forward_prepared(x, prepared, residual=True)
    out2 = jax.block_until_ready(out2)
    ref2 = _reference(x, weight, bias, indices=idx, residual=True)
    assert out2.shape == (B, S, idx.shape[0])
    assert jnp.allclose(out2, ref2, atol=2e-2, rtol=2e-2)    # bf16 tolerance

    print("KERNEL_OK")
</pallas_src>

<mosaic_0001>
module attributes {stable_mosaic.version = 11 : i64} {
  func.func @_ffn_kernel(%arg0: i32, %arg1: i32, %arg2: i32, %arg3: memref<16x128xf32, #tpu.memory_space<vmem>>, %arg4: memref<128x128xf32, #tpu.memory_space<vmem>>, %arg5: memref<1x128xf32, #tpu.memory_space<vmem>>, %arg6: memref<16x128xf32, #tpu.memory_space<vmem>>) attributes {dimension_semantics = [#tpu.dimension_semantics<parallel>, #tpu.dimension_semantics<parallel>, #tpu.dimension_semantics<arbitrary>], iteration_bounds = array<i64: 1, 1, 1>, scalar_prefetch = 0 : i64, scratch_operands = 0 : i64, tpu.core_type = #tpu.core_type<tc>, window_params = [{transform_indices = @transform_0, window_bounds = array<i64: 16, 128>}, {transform_indices = @transform_1, window_bounds = array<i64: 128, 128>}, {transform_indices = @transform_2, window_bounds = array<i64: 1, 128>}, {transform_indices = @transform_3, window_bounds = array<i64: 16, 128>}]} {
    %c0_i32 = arith.constant 0 : i32
    %0 = arith.cmpi eq, %arg2, %c0_i32 : i32
    %1 = arith.extui %0 : i1 to i32
    %c0_i32_0 = arith.constant 0 : i32
    %2 = arith.cmpi ne, %1, %c0_i32_0 : i32
    scf.if %2 {
      %cst_10 = arith.constant 0.000000e+00 : f32
      %12 = vector.broadcast %cst_10 : f32 to vector<16x128xf32>
      %c0_11 = arith.constant 0 : index
      %c0_12 = arith.constant 0 : index
      %13 = vector.load %arg6[%c0_11, %c0_12] : memref<16x128xf32, #tpu.memory_space<vmem>>, vector<16x128xf32>
      tpu.vector_store %arg6[%c0_11, %c0_12], %12 {strides = array<i32>} : memref<16x128xf32, #tpu.memory_space<vmem>>, vector<16x128xf32>,
    } else {
    }
    %c0 = arith.constant 0 : index
    %c0_1 = arith.constant 0 : index
    %3 = vector.load %arg6[%c0, %c0_1] : memref<16x128xf32, #tpu.memory_space<vmem>>, vector<16x128xf32>
    %c0_2 = arith.constant 0 : index
    %c0_3 = arith.constant 0 : index
    %4 = vector.load %arg3[%c0_2, %c0_3] : memref<16x128xf32, #tpu.memory_space<vmem>>, vector<16x128xf32>
    %c0_4 = arith.constant 0 : index
    %c0_5 = arith.constant 0 : index
    %5 = vector.load %arg4[%c0_4, %c0_5] : memref<128x128xf32, #tpu.memory_space<vmem>>, vector<128x128xf32>
    %cst = arith.constant dense<0.000000e+00> : vector<16x128xf32>
    %6 = tpu.matmul %4, %5, %cst {dimension_numbers = #tpu.dot_dimension_numbers<[1], [0], [0], [1], [0, 0, 1, 1], [], []>} : vector<16x128xf32>, vector<128x128xf32>, vector<16x128xf32> -> vector<16x128xf32>
    %7 = arith.addf %3, %6 : vector<16x128xf32>
    %c0_6 = arith.constant 0 : index
    %c0_7 = arith.constant 0 : index
    %8 = vector.load %arg6[%c0_6, %c0_7] : memref<16x128xf32, #tpu.memory_space<vmem>>, vector<16x128xf32>
    tpu.vector_store %arg6[%c0_6, %c0_7], %7 {strides = array<i32>} : memref<16x128xf32, #tpu.memory_space<vmem>>, vector<16x128xf32>,
    %c0_i32_8 = arith.constant 0 : i32
    %9 = arith.cmpi eq, %arg2, %c0_i32_8 : i32
    %10 = arith.extui %9 : i1 to i32
    %c0_i32_9 = arith.constant 0 : i32
    %11 = arith.cmpi ne, %10, %c0_i32_9 : i32
    scf.if %11 {
      %c0_10 = arith.constant 0 : index
      %c0_11 = arith.constant 0 : index
      %12 = vector.load %arg6[%c0_10, %c0_11] : memref<16x128xf32, #tpu.memory_space<vmem>>, vector<16x128xf32>
      %c0_12 = arith.constant 0 : index
      %c0_13 = arith.constant 0 : index
      %13 = vector.load %arg5[%c0_12, %c0_13] : memref<1x128xf32, #tpu.memory_space<vmem>>, vector<1x128xf32>
      %14 = vector.broadcast %13 : vector<1x128xf32> to vector<16x128xf32>
      %15 = arith.addf %12, %14 : vector<16x128xf32>
      %cst_14 = arith.constant 1.000000e-01 : f32
      %16 = vector.broadcast %cst_14 : f32 to vector<16x128xf32>
      %17 = arith.mulf %16, %15 : vector<16x128xf32>
      %18 = arith.maximumf %15, %17 : vector<16x128xf32>
      %c0_15 = arith.constant 0 : index
      %c0_16 = arith.constant 0 : index
      %19 = vector.load %arg6[%c0_15, %c0_16] : memref<16x128xf32, #tpu.memory_space<vmem>>, vector<16x128xf32>
      tpu.vector_store %arg6[%c0_15, %c0_16], %18 {strides = array<i32>} : memref<16x128xf32, #tpu.memory_space<vmem>>, vector<16x128xf32>,
    } else {
    }
    return
  }
  func.func @transform_0(%arg0: i32, %arg1: i32, %arg2: i32) -> (i32, i32) {
    %c0_i32 = arith.constant 0 : i32
    return %arg1, %arg2 : i32, i32
  }
  func.func @transform_1(%arg0: i32, %arg1: i32, %arg2: i32) -> (i32, i32) {
    %c0_i32 = arith.constant 0 : i32
    return %arg2, %arg0 : i32, i32
  }
  func.func @transform_2(%arg0: i32, %arg1: i32, %arg2: i32) -> (i32, i32) {
    %c0_i32 = arith.constant 0 : i32
    %c0_i32_0 = arith.constant 0 : i32
    return %c0_i32, %arg0 : i32, i32
  }
  func.func @transform_3(%arg0: i32, %arg1: i32, %arg2: i32) -> (i32, i32) {
    %c0_i32 = arith.constant 0 : i32
    return %arg1, %arg0 : i32, i32
  }
}

</mosaic_0001>

<llo_original>
// kernel: tpu_custom_call.1
$region0: #{tpu_custom_call.1}
  #allocation0 [shape = 'u32[]', space=smem, size = 0x4, offset = 0x4, fixed_abs, tag = 'smem constant byte address 0x4 - core index']
  #allocation1 [shape = 'u32[144,128]{1,0:T(1,128)}', space=vmem, size = 0x12000, scoped, tag = 'internal scratch']
  %s0 = inlined_call_operand.hbm [shape: f32[16,128], index: 0, kind: input, shape index: {}]
  %s1 = inlined_call_operand.hbm [shape: f32[128,128], index: 1, kind: input, shape index: {}]
  %s2 = inlined_call_operand.vmem [shape: f32[1,128], index: 2, kind: input, shape index: {}]
  %s3 = inlined_call_operand.hbm [shape: f32[16,128], index: 3, kind: output, shape index: {}]
  %s4 = sld [smem:[#allocation0]]
  $region38: #{tpu_custom_call.1} parent=0
    _
  %s6 = ssub.s32 1, %s4
  %s7 = scalar_select 0, %s6, %s4
  $region1: #{tpu_custom_call.1} parent=0
    #allocation2 [shape = 'u8[8192]{0}', space=vmem, size = 0x2000, scoped, tag = 'input window, operand 0, single buffered']
    #allocation3 [shape = 's32[1]{0}', space=sflag, size = 0x4, scoped, tag = 'scoped memory for tpu_custom_call.1']
    #allocation4 [shape = 's32[1]{0}', space=sflag, size = 0x4, scoped, tag = 'scoped memory for tpu_custom_call.1']
    #allocation5 [shape = 'u8[65536]{0}', space=vmem, size = 0x10000, scoped, tag = 'input window, operand 1, single buffered']
    #allocation6 [shape = 's32[1]{0}', space=sflag, size = 0x4, scoped, tag = 'scoped memory for tpu_custom_call.1']
    #allocation7 [shape = 'u8[8192]{0}', space=vmem, size = 0x2000, scoped, tag = 'output window, operand 0, single buffered']
    %8 = vsyncpa [#allocation3], 0
    %9 = vsyncpa [#allocation6], 0
    %10 = vsyncpa [#allocation4], 0
    // Predicated region
    $region2: #{tpu_custom_call.1} parent=1 // pred_check
      _
    $region3: #{tpu_custom_call.1} parent=1 // pred_check_branch
      %12 = sbr.rel (0) target = $region5
    $region4: #{tpu_custom_call.1} parent=1 // pred_region
      %s14 = ssub.s32 256, 256
      %15 = vsyncadd [#allocation3], %s14
      %s16 = sshll.u32 [#allocation2], 4
      %s17 = int_to_ptr.vmem [resolvable:$true] %s16
      %22 = dma.hbm_to_vmem [thread:$0]  %s0, 256, %s17, [#allocation3], 128, 128, 8
    $region5: #{tpu_custom_call.1} parent=1 // pred_fallthru
      _
    // Predicated region
    $region6: #{tpu_custom_call.1} parent=1 // pred_check
      _
    $region7: #{tpu_custom_call.1} parent=1 // pred_check_branch
      %24 = sbr.rel (0) target = $region9
    $region8: #{tpu_custom_call.1} parent=1 // pred_region
      %s26 = ssub.s32 2048, 2048
      %27 = vsyncadd [#allocation6], %s26
      %s28 = sshll.u32 [#allocation5], 4
      %s29 = int_to_ptr.vmem [resolvable:$true] %s28
      %34 = dma.hbm_to_vmem [thread:$0]  %s1, 2048, %s29, [#allocation6], 128, 128, 8
    $region9: #{tpu_custom_call.1} parent=1 // pred_fallthru
      _
    // Predicated region
    $region10: #{tpu_custom_call.1} parent=1 // pred_check
      _
    $region11: #{tpu_custom_call.1} parent=1 // pred_check_branch
      %36 = sbr.rel (0) target = $region13
    $region12: #{tpu_custom_call.1} parent=1 // pred_region
      _
    $region13: #{tpu_custom_call.1} parent=1 // pred_fallthru
      _
    // Predicated region
    $region14: #{tpu_custom_call.1} parent=1 // pred_check
      _
    $region15: #{tpu_custom_call.1} parent=1 // pred_check_branch
      %38 = sbr.rel (0) target = $region17
    $region16: #{tpu_custom_call.1} parent=1 // pred_region
      %39 = dma.done [#allocation3], 256
    $region17: #{tpu_custom_call.1} parent=1 // pred_fallthru
      _
    // Predicated region
    $region18: #{tpu_custom_call.1} parent=1 // pred_check
      _
    $region19: #{tpu_custom_call.1} parent=1 // pred_check_branch
      %41 = sbr.rel (0) target = $region21
    $region20: #{tpu_custom_call.1} parent=1 // pred_region
      %42 = dma.done [#allocation6], 2048
    $region21: #{tpu_custom_call.1} parent=1 // pred_fallthru
      _
    %p43 = scmp.eq.s32.totalorder 0, 0
    // Predicated region
    $region22: #{tpu_custom_call.1} parent=1 // pred_check
      %p44 = pneg %p43
    $region23: #{tpu_custom_call.1} parent=1 // pred_check_branch
      %46 = sbr.rel (%p44) target = $region25
    $region24: #{tpu_custom_call.1} parent=1 // pred_region
      %47 = vst [vmem:[#allocation7] sm:$0xff] 0.0
      %48 = vst [vmem:[#allocation7 + $0x8] sm:$0xff] 0.0
    $region25: #{tpu_custom_call.1} parent=1 // pred_fallthru
      _
    %v49 = vld [vmem:[#allocation7] sm:$0xff]
    %v50 = vld [vmem:[#allocation7 + $0x8] sm:$0xff]
    %v51 = vld [vmem:[#allocation2] sm:$0xff]
    %v52 = vld [vmem:[#allocation2 + $0x8] sm:$0xff]
    %v53 = vld [vmem:[#allocation5] sm:$0xff]
    %v54 = vld [vmem:[#allocation5 + $0x8] sm:$0xff]
    %v55 = vld [vmem:[#allocation5 + $0x10] sm:$0xff]
    %v56 = vld [vmem:[#allocation5 + $0x18] sm:$0xff]
    %v57 = vld [vmem:[#allocation5 + $0x20] sm:$0xff]
    %v58 = vld [vmem:[#allocation5 + $0x28] sm:$0xff]
    %v59 = vld [vmem:[#allocation5 + $0x30] sm:$0xff]
    %v60 = vld [vmem:[#allocation5 + $0x38] sm:$0xff]
    %v61 = vld [vmem:[#allocation5 + $0x40] sm:$0xff]
    %v62 = vld [vmem:[#allocation5 + $0x48] sm:$0xff]
    %v63 = vld [vmem:[#allocation5 + $0x50] sm:$0xff]
    %v64 = vld [vmem:[#allocation5 + $0x58] sm:$0xff]
    %v65 = vld [vmem:[#allocation5 + $0x60] sm:$0xff]
    %v66 = vld [vmem:[#allocation5 + $0x68] sm:$0xff]
    %v67 = vld [vmem:[#allocation5 + $0x70] sm:$0xff]
    %v68 = vld [vmem:[#allocation5 + $0x78] sm:$0xff]
    %69 = vmatprep.subr.mxu0 0.0
    %70 = vmatpush1.msra.mxu0 %v53
    %71 = vmatprep.subr.mxu0 0.0
    %72 = vmatpush1.msra.mxu0 %v54
    %73 = vmatprep.subr.mxu0 0.0
    %74 = vmatpush1.msra.mxu0 %v55
    %75 = vmatprep.subr.mxu0 0.0
    %76 = vmatpush1.msra.mxu0 %v56
    %77 = vmatprep.subr.mxu0 0.0
    %78 = vmatpush1.msra.mxu0 %v57
    %79 = vmatprep.subr.mxu0 0.0
    %80 = vmatpush1.msra.mxu0 %v58
    %81 = vmatprep.subr.mxu0 0.0
    %82 = vmatpush1.msra.mxu0 %v59
    %83 = vmatprep.subr.mxu0 0.0
    %84 = vmatpush1.msra.mxu0 %v60
    %85 = vmatprep.subr.mxu0 0.0
    %86 = vmatpush1.msra.mxu0 %v61
    %87 = vmatprep.subr.mxu0 0.0
    %88 = vmatpush1.msra.mxu0 %v62
    %89 = vmatprep.subr.mxu0 0.0
    %90 = vmatpush1.msra.mxu0 %v63
    %91 = vmatprep.subr.mxu0 0.0
    %92 = vmatpush1.msra.mxu0 %v64
    %93 = vmatprep.subr.mxu0 0.0
    %94 = vmatpush1.msra.mxu0 %v65
    %95 = vmatprep.subr.mxu0 0.0
    %96 = vmatpush1.msra.mxu0 %v66
    %97 = vmatprep.subr.mxu0 0.0
    %98 = vmatpush1.msra.mxu0 %v67
    %99 = vmatprep.subr.mxu0 0.0
    %100 = vmatpush1.msra.mxu0 %v68
    %101 = vmatprep.subr.mxu0 0.0
    %102 = vmatpush1.msra.mxu0 0.0
    %103 = vmatprep.subr.mxu0 0.0
    %104 = vmatpush1.msra.mxu0 0.0
    %105 = vmatprep.subr.mxu0 0.0
    %106 = vmatpush1.msra.mxu0 0.0
    %107 = vmatprep.subr.mxu0 0.0
    %108 = vmatpush1.msra.mxu0 0.0
    %109 = vmatprep.subr.mxu0 0.0
    %110 = vmatpush1.msra.mxu0 0.0
    %111 = vmatprep.subr.mxu0 0.0
    %112 = vmatpush1.msra.mxu0 0.0
    %113 = vmatprep.subr.mxu0 0.0
    %114 = vmatpush1.msra.mxu0 0.0
    %115 = vmatprep.subr.mxu0 0.0
    %116 = vmatpush1.msra.mxu0 0.0
    %117 = vmatprep.subr.mxu0 0.0
    %118 = vmatpush1.msra.mxu0 0.0
    %119 = vmatprep.subr.mxu0 0.0
    %120 = vmatpush1.msra.mxu0 0.0
    %121 = vmatprep.subr.mxu0 0.0
    %122 = vmatpush1.msra.mxu0 0.0
    %123 = vmatprep.subr.mxu0 0.0
    %124 = vmatpush1.msra.mxu0 0.0
    %125 = vmatprep.subr.mxu0 0.0
    %126 = vmatpush1.msra.mxu0 0.0
    %127 = vmatprep.subr.mxu0 0.0
    %128 = vmatpush1.msra.mxu0 0.0
    %129 = vmatprep.subr.mxu0 0.0
    %130 = vmatpush1.msra.mxu0 0.0
    %131 = vmatprep.subr.mxu0 0.0
    %132 = vmatpush1.msra.mxu0 0.0
    %133 = vmatprep.mubr.f32.mxu0 0.0
    %134 = vmatmul.mubr.f32.gmra.mrb[0].mxu0 %v51
    %v135 = vpop.f32.mrb[0].mxu0
    %v136 = vadd.f32 0.0, %v135
    %v137 = vpop.f32.mrb[0].mxu0
    %138 = vmatprep.mubr.f32.mxu0 0.0
    %139 = vmatmul.mubr.f32.gmra.mrb[0].mxu0 %v52
    %v140 = vpop.f32.mrb[0].mxu0
    %v141 = vadd.f32 0.0, %v140
    %v142 = vpop.f32.mrb[0].mxu0
    %143 = vdwg.mxu0
    %v144 = vadd.f32 %v49, %v136
    %v145 = vadd.f32 %v50, %v141
    %146 = vst [vmem:[#allocation7] sm:$0xff] %v144
    %147 = vst [vmem:[#allocation7 + $0x8] sm:$0xff] %v145
    // Predicated region
    $region26: #{tpu_custom_call.1} parent=1 // pred_check
      %p148 = pneg %p43
    $region27: #{tpu_custom_call.1} parent=1 // pred_check_branch
      %150 = sbr.rel (%p148) target = $region29
    $region28: #{tpu_custom_call.1} parent=1 // pred_region
      %v151 = vld [vmem:[#allocation7] sm:$0xff]
      %v152 = vld [vmem:[#allocation7 + $0x8] sm:$0xff]
      %v153 = vld [vmem:[%s2] sm:$0x1]
      %v155 = vlaneseq
      %v156 = vshrl.u32 %v155, 7
      %v157 = vsub.s32 0, %v156
      %v158 = vrot.slane %v153, %v157
      %v160 = vadd.f32 %v151, %v158
      %v161 = vadd.f32 %v152, %v158
      %v162 = vmul.f32 %v160, 0.1
      %v163 = vmul.f32 %v161, 0.1
      %v164 = vmax.f32 %v160, %v162
      %v165 = vmax.f32 %v161, %v163
      %166 = vst [vmem:[#allocation7] sm:$0xff] %v164
      %167 = vst [vmem:[#allocation7 + $0x8] sm:$0xff] %v165
    $region29: #{tpu_custom_call.1} parent=1 // pred_fallthru
      _
    // Predicated region
    $region30: #{tpu_custom_call.1} parent=1 // pred_check
      _
    $region31: #{tpu_custom_call.1} parent=1 // pred_check_branch
      %169 = sbr.rel (0) target = $region33
    $region32: #{tpu_custom_call.1} parent=1 // pred_region
      %s171 = ssub.s32 256, 256
      %172 = vsyncadd [#allocation4], %s171
      %s173 = sshll.u32 [#allocation7], 4
      %s174 = int_to_ptr.vmem [resolvable:$true] %s173
      %179 = dma.vmem_to_hbm [thread:$0]  %s174, 256, %s3, [#allocation4], 128, 128, 8
    $region33: #{tpu_custom_call.1} parent=1 // pred_fallthru
      _
    // Predicated region
    $region34: #{tpu_custom_call.1} parent=1 // pred_check
      _
    $region35: #{tpu_custom_call.1} parent=1 // pred_check_branch
      %181 = sbr.rel (0) target = $region37
    $region36: #{tpu_custom_call.1} parent=1 // pred_region
      %182 = dma.done [#allocation4], 256
    $region37: #{tpu_custom_call.1} parent=1 // pred_fallthru
      _
    %183 = vsyncpa [#allocation3], 1
    %184 = vsyncpa [#allocation6], 1
    %185 = vsyncpa [#allocation4], 1

</llo_original>
